<compile_context>
chip_gen: v5e
topology: v5e:2x2
jax: 0.10.0
libtpu: 0.0.40
codegen_flags: <defaults>
</compile_context>

<pallas_src>
import functools

import jax
import jax.numpy as jnp
from jax.experimental import pallas as pl
from jax.experimental.pallas import tpu as pltpu

BN_EPS = 1e-5
LANE = 128
SUBLANE = 8


def _round_up(x, m):
    return (x + m - 1) // m * m


def highway_kernel(x_ref, w_ref, b_ref, o_ref, *, od):
    """One fused matmul  x @ [W_lin | W_nl' | W_gate] + [b_lin | b_nl' | b_gate],
    then lane-aligned slices for the three branches and the highway combine."""
    x = x_ref[...]
    z = jnp.dot(x, w_ref[...], preferred_element_type=jnp.float32) + b_ref[...]
    linear = z[:, :od]
    nonlin = jnp.maximum(z[:, od:2 * od], 0.0)          # BN already folded into the weights
    gate = jax.nn.sigmoid(z[:, 2 * od:3 * od])
    # gate*nl + (1-gate)*lin == lin + gate*(nl - lin)
    o_ref[...] = (linear + gate * (nonlin - linear)).astype(o_ref.dtype)


def _fuse_params(params, od_pad, weight_dtype=None):
    """Fold BN into the nonlinear branch and pack all weights/biases into one slab."""
    out_dim = params["w_lin"].shape[1]
    scale = params["bn_gamma"] * jax.lax.rsqrt(params["bn_var"] + BN_EPS)     # (1, out_dim)
    w_nl = params["w_nl"] * scale                                             # column-wise
    b_nl = params["bn_beta"] - params["bn_mean"] * scale
    pad = od_pad - out_dim

    def pw(w):
        return jnp.pad(w, ((0, 0), (0, pad))) if pad else w

    w = jnp.concatenate([pw(params["w_lin"]), pw(w_nl), pw(params["w_gate"])], axis=1)
    b = jnp.concatenate([pw(params["b_lin"]), pw(b_nl), pw(params["b_gate"])], axis=1)
    if weight_dtype is not None:
        w = w.astype(weight_dtype)
    return w, b.astype(jnp.float32)


def highway_block(x, params, *, block_n=None, weight_dtype=None):
    """x: [N, in_dim]. params: dict of weights (see init_params)."""
    N, in_dim = x.shape
    out_dim = params["w_lin"].shape[1]

    # Lane-dense branch width: pad each branch's output columns to a multiple of 128.
    od_pad = _round_up(out_dim, LANE)
    fused_dim = 3 * od_pad

    # Row tiling: multiple of 8 sublanes, capped at 512 so grid >= 2 for large N
    # (pipelining + v7x dual-TC sharding).
    if block_n is None:
        block_n = min(512, _round_up(N, SUBLANE))
    block_n = min(_round_up(block_n, SUBLANE), _round_up(N, SUBLANE))

    w, b = _fuse_params(params, od_pad, weight_dtype)

    grid = (pl.cdiv(N, block_n),)
    x_item = x.dtype.itemsize
    w_item = w.dtype.itemsize

    # VMEM budget: x/out tiles and the (grid-invariant but double-buffered) weight slab.
    need = (2 * block_n * in_dim * x_item
            + 2 * (in_dim * fused_dim + fused_dim) * w_item
            + 2 * block_n * od_pad * x_item
            + block_n * fused_dim * 4                      # f32 fused-matmul result
            + (2 << 20))
    vmem_limit = None if need <= (32 << 20) else int(min(need, 100 << 20))
    # TODO(synk): on v7x (64 MiB VMEM) very large in_dim/out_dim would additionally want
    # single-buffered weights (pl.Buffered) or a K-reduction grid axis.

    cost = pl.CostEstimate(
        flops=2 * N * in_dim * fused_dim + 6 * N * od_pad,
        transcendentals=N * od_pad,                         # sigmoid exp
        bytes_accessed=(N * in_dim * x_item
                        + (in_dim + 1) * fused_dim * w_item
                        + N * od_pad * x_item),
    )

    out = pl.pallas_call(
        functools.partial(highway_kernel, od=od_pad),
        out_shape=jax.ShapeDtypeStruct((N, od_pad), x.dtype),
        grid_spec=pltpu.PrefetchScalarGridSpec(
            num_scalar_prefetch=0,
            grid=grid,
            in_specs=[
                pl.BlockSpec((block_n, in_dim), lambda i: (i, 0)),     # x row tile
                pl.BlockSpec((in_dim, fused_dim), lambda i: (0, 0)),   # fused weight slab
                pl.BlockSpec((1, fused_dim), lambda i: (0, 0)),        # fused bias
            ],
            out_specs=pl.BlockSpec((block_n, od_pad), lambda i: (i, 0)),
        ),
        compiler_params=pltpu.CompilerParams(
            dimension_semantics=("parallel",),
            vmem_limit_bytes=vmem_limit,
        ),
        cost_estimate=cost,
    )(x, w, b)

    return out if od_pad == out_dim else out[:, :out_dim]


def init_params(key, in_dim, out_dim):
    """Deterministic xavier_normal-style init for the three Linear layers + BN stats."""
    k1, k2, k3, k4, k5 = jax.random.split(key, 5)
    std = (2.0 / (in_dim + out_dim)) ** 0.5  # xavier_normal gain=1
    return {
        "w_lin":  std * jax.random.normal(k1, (in_dim, out_dim), jnp.float32),
        "b_lin":  0.01 * jnp.arange(out_dim, dtype=jnp.float32).reshape(1, out_dim),
        "w_nl":   std * jax.random.normal(k2, (in_dim, out_dim), jnp.float32),
        "w_gate": std * jax.random.normal(k3, (in_dim, out_dim), jnp.float32),
        "b_gate": -0.02 * jnp.arange(out_dim, dtype=jnp.float32).reshape(1, out_dim),
        # BatchNorm1d (inference mode) parameters / running stats:
        "bn_gamma": 1.0 + 0.05 * jax.random.normal(k4, (1, out_dim), jnp.float32),
        "bn_beta":  0.05 * jax.random.normal(k5, (1, out_dim), jnp.float32),
        "bn_mean":  0.1 * jnp.sin(jnp.arange(out_dim, dtype=jnp.float32)).reshape(1, out_dim),
        "bn_var":   1.0 + 0.1 * jnp.cos(jnp.arange(out_dim, dtype=jnp.float32)).reshape(1, out_dim) ** 2,
    }


def highway_ref(x, p):
    """Pure-JAX reference (un-fused) for validation."""
    linear = x @ p["w_lin"] + p["b_lin"]
    nl = x @ p["w_nl"]
    nl = (nl - p["bn_mean"]) / jnp.sqrt(p["bn_var"] + BN_EPS) * p["bn_gamma"] + p["bn_beta"]
    nl = jnp.maximum(nl, 0.0)
    gate = jax.nn.sigmoid(x @ p["w_gate"] + p["b_gate"])
    return gate * nl + (1.0 - gate) * linear


if __name__ == "__main__":
    key = jax.random.PRNGKey(0)
    kx, kp = jax.random.split(key)

    N, in_dim, out_dim = 64, 32, 32
    x = jax.random.normal(kx, (N, in_dim), jnp.float32)
    params = init_params(kp, in_dim, out_dim)

    ref = highway_ref(x, params)

    # Multi-tile grid (grid=(2,)): exercises row pipelining / parallel row sharding.
    out = jax.block_until_ready(highway_block(x, params, block_n=32))
    assert out.shape == (N, out_dim)
    assert jnp.allclose(out, ref, atol=1e-4, rtol=1e-4), "mismatch vs reference (tiled)"

    # Default tiling path.
    out2 = jax.block_until_ready(highway_block(x, params))
    assert out2.shape == (N, out_dim)
    assert jnp.allclose(out2, ref, atol=1e-4, rtol=1e-4), "mismatch vs reference (default)"

    print("KERNEL_OK")
</pallas_src>

<mosaic_0001>
module attributes {stable_mosaic.version = 11 : i64} {
  func.func @highway_kernel(%arg0: i32, %arg1: memref<32x32xf32, #tpu.memory_space<vmem>>, %arg2: memref<32x384xf32, #tpu.memory_space<vmem>>, %arg3: memref<1x384xf32, #tpu.memory_space<vmem>>, %arg4: memref<32x128xf32, #tpu.memory_space<vmem>>) attributes {dimension_semantics = [#tpu.dimension_semantics<parallel>], iteration_bounds = array<i64: 2>, scalar_prefetch = 0 : i64, scratch_operands = 0 : i64, tpu.core_type = #tpu.core_type<tc>, window_params = [{transform_indices = @transform_0, window_bounds = array<i64: 32, 32>}, {pipeline_mode = #tpu.pipeline_mode<synchronous>, transform_indices = @transform_1, window_bounds = array<i64: 32, 384>}, {pipeline_mode = #tpu.pipeline_mode<synchronous>, transform_indices = @transform_2, window_bounds = array<i64: 1, 384>}, {transform_indices = @transform_3, window_bounds = array<i64: 32, 128>}]} {
    %c0 = arith.constant 0 : index
    %c0_0 = arith.constant 0 : index
    %0 = vector.load %arg1[%c0, %c0_0] : memref<32x32xf32, #tpu.memory_space<vmem>>, vector<32x32xf32>
    %c0_1 = arith.constant 0 : index
    %c0_2 = arith.constant 0 : index
    %1 = vector.load %arg2[%c0_1, %c0_2] : memref<32x384xf32, #tpu.memory_space<vmem>>, vector<32x384xf32>
    %cst = arith.constant dense<0.000000e+00> : vector<32x384xf32>
    %2 = tpu.matmul %0, %1, %cst {dimension_numbers = #tpu.dot_dimension_numbers<[1], [0], [0], [1], [0, 0, 1, 1], [], []>} : vector<32x32xf32>, vector<32x384xf32>, vector<32x384xf32> -> vector<32x384xf32>
    %c0_3 = arith.constant 0 : index
    %c0_4 = arith.constant 0 : index
    %3 = vector.load %arg3[%c0_3, %c0_4] : memref<1x384xf32, #tpu.memory_space<vmem>>, vector<1x384xf32>
    %4 = vector.broadcast %3 : vector<1x384xf32> to vector<32x384xf32>
    %5 = arith.addf %2, %4 : vector<32x384xf32>
    %6 = vector.extract_strided_slice %5 {offsets = [0, 0], sizes = [32, 128], strides = [1, 1]} : vector<32x384xf32> to vector<32x128xf32>
    %7 = vector.extract_strided_slice %5 {offsets = [0, 128], sizes = [32, 128], strides = [1, 1]} : vector<32x384xf32> to vector<32x128xf32>
    %cst_5 = arith.constant 0.000000e+00 : f32
    %8 = vector.broadcast %cst_5 : f32 to vector<32x128xf32>
    %9 = arith.maximumf %7, %8 : vector<32x128xf32>
    %10 = vector.extract_strided_slice %5 {offsets = [0, 256], sizes = [32, 128], strides = [1, 1]} : vector<32x384xf32> to vector<32x128xf32>
    %11 = arith.negf %10 : vector<32x128xf32>
    %12 = math.exp %11 : vector<32x128xf32>
    %cst_6 = arith.constant 1.000000e+00 : f32
    %13 = vector.broadcast %cst_6 : f32 to vector<32x128xf32>
    %14 = arith.addf %13, %12 : vector<32x128xf32>
    %15 = arith.divf %13, %14 : vector<32x128xf32>
    %16 = arith.subf %9, %6 : vector<32x128xf32>
    %17 = arith.mulf %15, %16 : vector<32x128xf32>
    %18 = arith.addf %6, %17 : vector<32x128xf32>
    %c0_7 = arith.constant 0 : index
    %c0_8 = arith.constant 0 : index
    %19 = vector.load %arg4[%c0_7, %c0_8] : memref<32x128xf32, #tpu.memory_space<vmem>>, vector<32x128xf32>
    tpu.vector_store %arg4[%c0_7, %c0_8], %18 {strides = array<i32>} : memref<32x128xf32, #tpu.memory_space<vmem>>, vector<32x128xf32>,
    return
  }
  func.func @transform_0(%arg0: i32) -> (i32, i32) {
    %c0_i32 = arith.constant 0 : i32
    %c0_i32_0 = arith.constant 0 : i32
    return %arg0, %c0_i32 : i32, i32
  }
  func.func @transform_1(%arg0: i32) -> (i32, i32) {
    %c0_i32 = arith.constant 0 : i32
    %c0_i32_0 = arith.constant 0 : i32
    %c0_i32_1 = arith.constant 0 : i32
    return %c0_i32, %c0_i32_0 : i32, i32
  }
  func.func @transform_2(%arg0: i32) -> (i32, i32) {
    %c0_i32 = arith.constant 0 : i32
    %c0_i32_0 = arith.constant 0 : i32
    %c0_i32_1 = arith.constant 0 : i32
    return %c0_i32, %c0_i32_0 : i32, i32
  }
  func.func @transform_3(%arg0: i32) -> (i32, i32) {
    %c0_i32 = arith.constant 0 : i32
    %c0_i32_0 = arith.constant 0 : i32
    return %arg0, %c0_i32 : i32, i32
  }
}

</mosaic_0001>

<llo_original>
// kernel: tpu_custom_call.1
$region0: #{tpu_custom_call.1}
  #allocation0 [shape = 'u32[]', space=smem, size = 0x4, offset = 0x4, fixed_abs, tag = 'smem constant byte address 0x4 - core index']
  #allocation1 [shape = 'u32[72,128]{1,0:T(1,128)}', space=vmem, size = 0x9000, scoped, tag = 'internal scratch']
  %s0 = inlined_call_operand.vmem [shape: f32[64,32], index: 0, kind: input, shape index: {}]
  %s1 = inlined_call_operand.vmem [shape: f32[32,384], index: 1, kind: input, shape index: {}]
  %s2 = inlined_call_operand.hbm [shape: f32[1,384], index: 2, kind: input, shape index: {}]
  %s3 = inlined_call_operand.hbm [shape: f32[64,128], index: 3, kind: output, shape index: {}]
  %s4 = sld [smem:[#allocation0]]
  $region49: #{tpu_custom_call.1} parent=0
    _
  %s6 = ssub.s32 1, %s4
  %s7 = scalar_select 0, %s6, %s4
  $region1: #{tpu_custom_call.1} parent=0
    #allocation2 [shape = 'u8[1536]{0}', space=vmem, size = 0x800, scoped, tag = 'input window, operand 2, single buffered']
    #allocation3 [shape = 's32[2]{0}', space=sflag, size = 0x8, scoped, tag = 'scoped memory for tpu_custom_call.1']
    #allocation4 [shape = 's32[2]{0}', space=sflag, size = 0x8, scoped, tag = 'scoped memory for tpu_custom_call.1']
    #allocation5 [shape = 'u8[32768]{0}', space=vmem, size = 0x8000, scoped, tag = 'output window, operand 0']
    %8 = vsyncpa [#allocation3], 0
    %9 = vsyncpa [#allocation4], 0
    %s10 = scalar_lea.sflag [#allocation4], 1
    %11 = vsyncpa %s10, 0
    loop: start=0, step=1, limit=4
    $region2: #{tpu_custom_call.1} parent=1 // loop_pre_header
      _
    $region3: #{tpu_custom_call.1} parent=1 // loop_header
      %s13 = sphi 0, %s17
      %p14 = scmp.ge.s32.totalorder %s13, 4
      %s23 = sphi 0, %s25
      %s26 = sphi 0, %s23
      %s27 = sphi 0, %s26
      %s43 = sphi 0, %s27
      %s47 = sphi 0, %s47
      %s49 = sphi 0, %s47
      %s50 = sphi 0, %s49
      %s64 = sphi 0, %s50
      %s68 = sphi 0, %s68
      %s70 = sphi 0, %s68
      %s71 = sphi 0, %s70
      %s85 = sphi 0, %s71
      %s91 = sphi 0, %s93
      %s94 = sphi 0, %s91
      %s95 = sphi 0, %s94
      %s111 = sphi 0, %s95
    $region4: #{tpu_custom_call.1} parent=1 // loop_header_branch
      %16 = sbr.rel (%p14) target = $region8
    $region5: #{tpu_custom_call.1} parent=1 // loop_body
      %s18 = ssub.s32 %s13, 1
      %s19 = ssub.s32 %s13, 2
      %s20 = sadd.s32 %s13, 1
      %s21 = ssub.s32 %s13, %s20
      %p22 = scmp.eq.s32.totalorder %s21, 0
      %s24 = sadd.s32 %s23, 1
      %s25 = scalar_select %p22, %s23, %s24
      %p28 = pneg %p22
      %p29 = scmp.eq.s32.totalorder %s13, 1
      %p30 = por %p28, %p29
      %p31 = scmp.ne.s32.totalorder %s23, %s26
      %p32 = scmp.eq.s32.totalorder %s13, 0
      %p33 = por %p31, %p32
      %p34 = scmp.ne.s32.totalorder %s23, %s26
      %p35 = scmp.eq.s32.totalorder %s18, 1
      %p36 = por %p34, %p35
      %p37 = scmp.ne.s32.totalorder %s26, %s27
      %p38 = scmp.eq.s32.totalorder %s18, 0
      %p39 = por %p37, %p38
      %p40 = scmp.ne.s32.totalorder %s26, %s27
      %p41 = scmp.eq.s32.totalorder %s19, 1
      %p42 = por %p40, %p41
      %p44 = scmp.ne.s32.totalorder %s27, %s43
      %p45 = scmp.eq.s32.totalorder %s19, 0
      %p46 = por %p44, %p45
      %s48 = sadd.s32 %s47, 1
      %p51 = scmp.eq.s32.totalorder %s13, 1
      %p52 = scmp.ne.s32.totalorder %s47, %s49
      %p53 = scmp.eq.s32.totalorder %s13, 0
      %p54 = por %p52, %p53
      %p55 = scmp.ne.s32.totalorder %s47, %s49
      %p56 = scmp.eq.s32.totalorder %s18, 1
      %p57 = por %p55, %p56
      %p58 = scmp.ne.s32.totalorder %s49, %s50
      %p59 = scmp.eq.s32.totalorder %s18, 0
      %p60 = por %p58, %p59
      %p61 = scmp.ne.s32.totalorder %s49, %s50
      %p62 = scmp.eq.s32.totalorder %s19, 1
      %p63 = por %p61, %p62
      %p65 = scmp.ne.s32.totalorder %s50, %s64
      %p66 = scmp.eq.s32.totalorder %s19, 0
      %p67 = por %p65, %p66
      %s69 = sadd.s32 %s68, 1
      %p72 = scmp.eq.s32.totalorder %s13, 1
      %p73 = scmp.ne.s32.totalorder %s68, %s70
      %p74 = scmp.eq.s32.totalorder %s13, 0
      %p75 = por %p73, %p74
      %p76 = scmp.ne.s32.totalorder %s68, %s70
      %p77 = scmp.eq.s32.totalorder %s18, 1
      %p78 = por %p76, %p77
      %p79 = scmp.ne.s32.totalorder %s70, %s71
      %p80 = scmp.eq.s32.totalorder %s18, 0
      %p81 = por %p79, %p80
      %p82 = scmp.ne.s32.totalorder %s70, %s71
      %p83 = scmp.eq.s32.totalorder %s19, 1
      %p84 = por %p82, %p83
      %p86 = scmp.ne.s32.totalorder %s71, %s85
      %p87 = scmp.eq.s32.totalorder %s19, 0
      %p88 = por %p86, %p87
      %s89 = ssub.s32 %s13, %s20
      %p90 = scmp.eq.s32.totalorder %s89, 0
      %s92 = sadd.s32 %s91, 1
      %s93 = scalar_select %p90, %s91, %s92
      %p96 = pneg %p90
      %p97 = scmp.eq.s32.totalorder %s13, 1
      %p98 = por %p96, %p97
      %p99 = scmp.ne.s32.totalorder %s91, %s94
      %p100 = scmp.eq.s32.totalorder %s13, 0
      %p101 = por %p99, %p100
      %p102 = scmp.ne.s32.totalorder %s91, %s94
      %p103 = scmp.eq.s32.totalorder %s18, 1
      %p104 = por %p102, %p103
      %p105 = scmp.ne.s32.totalorder %s94, %s95
      %p106 = scmp.eq.s32.totalorder %s18, 0
      %p107 = por %p105, %p106
      %p108 = scmp.ne.s32.totalorder %s94, %s95
      %p109 = scmp.eq.s32.totalorder %s19, 1
      %p110 = por %p108, %p109
      %p112 = scmp.ne.s32.totalorder %s95, %s111
      %p113 = scmp.eq.s32.totalorder %s19, 0
      %p114 = por %p112, %p113
      %p115 = scmp.le.s32.totalorder 1, %s13
      %p116 = scmp.lt.s32.totalorder %s13, 3
      %p117 = pnand %p115, %p116
      %p118 = pneg %p117
      // Predicated region
      $region9: #{tpu_custom_call.1} parent=5 // pred_check
        _
      $region10: #{tpu_custom_call.1} parent=5 // pred_check_branch
        %120 = sbr.rel (%p117) target = $region12
      $region11: #{tpu_custom_call.1} parent=5 // pred_region
        %s121 = ssub.s32 %s13, 1
        // Predicated region
        $region13: #{tpu_custom_call.1} parent=11 // pred_check
          %p122 = pneg %p60
        $region14: #{tpu_custom_call.1} parent=11 // pred_check_branch
          %124 = sbr.rel (%p122) target = $region16
        $region15: #{tpu_custom_call.1} parent=11 // pred_region
          _
        $region16: #{tpu_custom_call.1} parent=11 // pred_fallthru
          _
        // Predicated region
        $region17: #{tpu_custom_call.1} parent=11 // pred_check
          %p125 = pneg %p81
        $region18: #{tpu_custom_call.1} parent=11 // pred_check_branch
          %127 = sbr.rel (%p125) target = $region20
        $region19: #{tpu_custom_call.1} parent=11 // pred_region
          %129 = vsyncadd [#allocation3], 0
          %s131 = sshll.u32 %s2, 4
          %s132 = int_to_ptr.hbm [resolvable:$true] %s131
          %s133 = sshll.u32 [#allocation2], 4
          %s134 = int_to_ptr.vmem [resolvable:$true] %s133
          %136 = dma.hbm_to_vmem [thread:$0]  %s132, 48, %s134, [#allocation3]
        $region20: #{tpu_custom_call.1} parent=11 // pred_fallthru
          _
      $region12: #{tpu_custom_call.1} parent=5 // pred_fallthru
        _
      %p137 = scmp.lt.s32.totalorder %s13, 2
      // Predicated region
      $region21: #{tpu_custom_call.1} parent=5 // pred_check
        %p138 = pneg %p137
      $region22: #{tpu_custom_call.1} parent=5 // pred_check_branch
        %140 = sbr.rel (%p138) target = $region24
      $region23: #{tpu_custom_call.1} parent=5 // pred_region
        // Predicated region
        $region25: #{tpu_custom_call.1} parent=23 // pred_check
          %p141 = pneg %p33
        $region26: #{tpu_custom_call.1} parent=23 // pred_check_branch
          %143 = sbr.rel (%p141) target = $region28
        $region27: #{tpu_custom_call.1} parent=23 // pred_region
          %s144 = smul.u32 4, %s13
          %p145 = scmp.lt.s32.totalorder %s144, 7
          %s146 = scalar_select %p145, %s144, 7
          %s147 = smul.addr %s146, 8
          %s148 = scalar_lea.vmem %s0, %s147
          %s149 = smul.u32 4, %s13
        $region28: #{tpu_custom_call.1} parent=23 // pred_fallthru
          _
      $region24: #{tpu_custom_call.1} parent=5 // pred_fallthru
        _
      %p150 = scmp.le.s32.totalorder 1, %s13
      %p151 = scmp.lt.s32.totalorder %s13, 3
      %p152 = pnand %p150, %p151
      %p153 = pneg %p152
      // Predicated region
      $region29: #{tpu_custom_call.1} parent=5 // pred_check
        _
      $region30: #{tpu_custom_call.1} parent=5 // pred_check_branch
        %155 = sbr.rel (%p152) target = $region32
      $region31: #{tpu_custom_call.1} parent=5 // pred_region
        %s156 = ssub.s32 %s13, 1
        // Predicated region
        $region33: #{tpu_custom_call.1} parent=31 // pred_check
          %p157 = pneg %p81
        $region34: #{tpu_custom_call.1} parent=31 // pred_check_branch
          %159 = sbr.rel (%p157) target = $region36
        $region35: #{tpu_custom_call.1} parent=31 // pred_region
          %161 = dma.done [#allocation3], 48
        $region36: #{tpu_custom_call.1} parent=31 // pred_fallthru
          _
        %s162 = smul.u32 4, %s18
        %p163 = scmp.lt.s32.totalorder %s162, 7
        %s164 = scalar_select %p163, %s162, 7
        %s165 = smul.addr %s164, 8
        %s166 = scalar_lea.vmem %s0, %s165
        %p167 = pneg %p39
        %p168 = pneg %p36
        %p169 = pneg %p60
        %p170 = pneg %p57
        %p171 = pneg %p81
        %p172 = pneg %p78
        %p173 = pneg %p107
        %p174 = pneg %p104
        %s175 = sand.u32 %s94, 1
        %s176 = scalar_lea.sflag [#allocation4], %s175
        %s177 = sand.u32 %s94, 1
        %s178 = smul.addr %s177, 32
        %s179 = scalar_lea.vmem [#allocation5], %s178
        %s180 = smul.u32 4, %s18
        %p181 = scmp.lt.s32.totalorder %s180, 7
        %s182 = scalar_select %p181, %s180, 7
        %s183 = smul.addr %s182, 8
        %s184 = scalar_lea.vmem %s0, %s183
        %s185 = smul.u32 4, %s18
        %s186 = smul.u32 4, %s18
        %v187 = vld [vmem:[%s184] sm:$0xff]
        %v188 = vld [vmem:[%s184 + $0x8] sm:$0xff]
        %v189 = vld [vmem:[%s184 + $0x10] sm:$0xff]
        %v190 = vld [vmem:[%s184 + $0x18] sm:$0xff]
        %v191 = vld [vmem:[%s1] sm:$0xff]
        %v192 = vld [vmem:[%s1 + $0x8] sm:$0xff]
        %v193 = vld [vmem:[%s1 + $0x10] sm:$0xff]
        %v194 = vld [vmem:[%s1 + $0x18] sm:$0xff]
        %v195 = vld [vmem:[%s1 + $0x20] sm:$0xff]
        %v196 = vld [vmem:[%s1 + $0x28] sm:$0xff]
        %v197 = vld [vmem:[%s1 + $0x30] sm:$0xff]
        %v198 = vld [vmem:[%s1 + $0x38] sm:$0xff]
        %v199 = vld [vmem:[%s1 + $0x40] sm:$0xff]
        %v200 = vld [vmem:[%s1 + $0x48] sm:$0xff]
        %v201 = vld [vmem:[%s1 + $0x50] sm:$0xff]
        %v202 = vld [vmem:[%s1 + $0x58] sm:$0xff]
        %v203 = vld [vmem:[#allocation2] sm:$0x7]
        %v205 = vperm.slane %v203, 0
        %v206 = vperm.slane %v203, 1
        %v207 = vperm.slane %v203, 2
        %vm211 = vcmask 261120
        %v213 = vsel %vm211, %v187, 0
        %v216 = vsel %vm211, %v188, 0
        %v219 = vsel %vm211, %v189, 0
        %v222 = vsel %vm211, %v190, 0
        %224 = vmatpush.msra.mxu0 0.0
        %225 = vmatpush.msra.mxu0 0.0
        %226 = vmatpush.msra.mxu0 0.0
        %227 = vmatpush.msra.mxu0 0.0
        %228 = vmatpush.msra.mxu0 0.0
        %229 = vmatpush.msra.mxu0 0.0
        %230 = vmatpush.msra.mxu0 0.0
        %231 = vmatpush.msra.mxu0 0.0
        %232 = vmatpush.msra.mxu0 0.0
        %233 = vmatpush.msra.mxu0 0.0
        %234 = vmatpush.msra.mxu0 0.0
        %235 = vmatpush.msra.mxu0 0.0
        %236 = vmatpush.msra.mxu0 %v200
        %237 = vmatpush.msra.mxu0 %v197
        %238 = vmatpush.msra.mxu0 %v194
        %239 = vmatpush.msra.mxu0 %v191
        %240 = vmatmul.f32.gmra.mxu0 %v213
        %v241 = vpop.f32.mrf.mxu0
        %v242 = vadd.f32 %v205, %v241
        %243 = vmatmul.f32.gmra.mxu0 %v216
        %v244 = vpop.f32.mrf.mxu0
        %v245 = vadd.f32 %v205, %v244
        %246 = vmatmul.f32.gmra.mxu0 %v219
        %v247 = vpop.f32.mrf.mxu0
        %v248 = vadd.f32 %v205, %v247
        %249 = vmatmul.f32.gmra.mxu0 %v222
        %v250 = vpop.f32.mrf.mxu0
        %v251 = vadd.f32 %v205, %v250
        %252 = vdwg.mxu0
        %253 = vmatpush.msra.mxu0 0.0
        %254 = vmatpush.msra.mxu0 0.0
        %255 = vmatpush.msra.mxu0 0.0
        %256 = vmatpush.msra.mxu0 0.0
        %257 = vmatpush.msra.mxu0 0.0
        %258 = vmatpush.msra.mxu0 0.0
        %259 = vmatpush.msra.mxu0 0.0
        %260 = vmatpush.msra.mxu0 0.0
        %261 = vmatpush.msra.mxu0 0.0
        %262 = vmatpush.msra.mxu0 0.0
        %263 = vmatpush.msra.mxu0 0.0
        %264 = vmatpush.msra.mxu0 0.0
        %265 = vmatpush.msra.mxu0 %v201
        %266 = vmatpush.msra.mxu0 %v198
        %267 = vmatpush.msra.mxu0 %v195
        %268 = vmatpush.msra.mxu0 %v192
        %269 = vmatmul.f32.gmra.mxu0 %v213
        %v270 = vpop.f32.mrf.mxu0
        %v271 = vadd.f32 %v206, %v270
        %272 = vmatmul.f32.gmra.mxu0 %v216
        %v273 = vpop.f32.mrf.mxu0
        %v274 = vadd.f32 %v206, %v273
        %275 = vmatmul.f32.gmra.mxu0 %v219
        %v276 = vpop.f32.mrf.mxu0
        %v277 = vadd.f32 %v206, %v276
        %278 = vmatmul.f32.gmra.mxu0 %v222
        %v279 = vpop.f32.mrf.mxu0
        %v280 = vadd.f32 %v206, %v279
        %281 = vdwg.mxu0
        %282 = vmatpush.msra.mxu0 0.0
        %283 = vmatpush.msra.mxu0 0.0
        %284 = vmatpush.msra.mxu0 0.0
        %285 = vmatpush.msra.mxu0 0.0
        %286 = vmatpush.msra.mxu0 0.0
        %287 = vmatpush.msra.mxu0 0.0
        %288 = vmatpush.msra.mxu0 0.0
        %289 = vmatpush.msra.mxu0 0.0
        %290 = vmatpush.msra.mxu0 0.0
        %291 = vmatpush.msra.mxu0 0.0
        %292 = vmatpush.msra.mxu0 0.0
        %293 = vmatpush.msra.mxu0 0.0
        %294 = vmatpush.msra.mxu0 %v202
        %295 = vmatpush.msra.mxu0 %v199
        %296 = vmatpush.msra.mxu0 %v196
        %297 = vmatpush.msra.mxu0 %v193
        %298 = vmatmul.f32.gmra.mxu0 %v213
        %v299 = vpop.f32.mrf.mxu0
        %v300 = vadd.f32 %v207, %v299
        %301 = vmatmul.f32.gmra.mxu0 %v216
        %v302 = vpop.f32.mrf.mxu0
        %v303 = vadd.f32 %v207, %v302
        %304 = vmatmul.f32.gmra.mxu0 %v219
        %v305 = vpop.f32.mrf.mxu0
        %v306 = vadd.f32 %v207, %v305
        %307 = vmatmul.f32.gmra.mxu0 %v222
        %v308 = vpop.f32.mrf.mxu0
        %v309 = vadd.f32 %v207, %v308
        %310 = vdwg.mxu0
        %v311 = vmax.f32 %v271, 0.0
        %v312 = vmax.f32 %v274, 0.0
        %v313 = vmax.f32 %v277, 0.0
        %v314 = vmax.f32 %v280, 0.0
        %v315 = vxor.u32 %v300, 2147483648
        %v316 = vxor.u32 %v303, 2147483648
        %v317 = vxor.u32 %v306, 2147483648
        %v318 = vxor.u32 %v309, 2147483648
        %v319 = vmul.f32 %v315, 1.442695
        %v320 = vpow.pop %v319
        %v321 = vmul.f32 %v316, 1.442695
        %v322 = vpow.pop %v321
        %v323 = vmul.f32 %v317, 1.442695
        %v324 = vpow.pop %v323
        %v325 = vmul.f32 %v318, 1.442695
        %v326 = vpow.pop %v325
        %v327 = vadd.f32 %v320, 1.0
        %v328 = vadd.f32 %v322, 1.0
        %v329 = vadd.f32 %v324, 1.0
        %v330 = vadd.f32 %v326, 1.0
        %v331 = vrcp.pop %v327
        %v332 = vmul.f32 %v327, %v331
        %v333 = vsub.f32 1.0, %v332
        %v334 = vmul.f32 %v331, %v333
        %v335 = vadd.f32 %v331, %v334
        %vm336 = vweird.f32 %v327
        %vm337 = vweird.f32 %v331
        %vm338 = vmor %vm336, %vm337
        %v339 = vsel %vm338, %v331, %v335
        %v340 = vand.u32 2147483647, %v327
        %vm341 = vcmp.eq.f32.partialorder %v340, 8.507059e+37
        %v342 = vand.u32 %v327, 2147483648
        %v343 = vor.u32 1.1754944e-38, %v342
        %v344 = vsel %vm341, %v343, %v339
        %v345 = vmul.f32 1.0, %v344
        %v346 = vrcp.pop %v328
        %v347 = vmul.f32 %v328, %v346
        %v348 = vsub.f32 1.0, %v347
        %v349 = vmul.f32 %v346, %v348
        %v350 = vadd.f32 %v346, %v349
        %vm351 = vweird.f32 %v328
        %vm352 = vweird.f32 %v346
        %vm353 = vmor %vm351, %vm352
        %v354 = vsel %vm353, %v346, %v350
        %v355 = vand.u32 2147483647, %v328
        %vm356 = vcmp.eq.f32.partialorder %v355, 8.507059e+37
        %v357 = vand.u32 %v328, 2147483648
        %v358 = vor.u32 1.1754944e-38, %v357
        %v359 = vsel %vm356, %v358, %v354
        %v360 = vmul.f32 1.0, %v359
        %v361 = vrcp.pop %v329
        %v362 = vmul.f32 %v329, %v361
        %v363 = vsub.f32 1.0, %v362
        %v364 = vmul.f32 %v361, %v363
        %v365 = vadd.f32 %v361, %v364
        %vm366 = vweird.f32 %v329
        %vm367 = vweird.f32 %v361
        %vm368 = vmor %vm366, %vm367
        %v369 = vsel %vm368, %v361, %v365
        %v370 = vand.u32 2147483647, %v329
        %vm371 = vcmp.eq.f32.partialorder %v370, 8.507059e+37
        %v372 = vand.u32 %v329, 2147483648
        %v373 = vor.u32 1.1754944e-38, %v372
        %v374 = vsel %vm371, %v373, %v369
        %v375 = vmul.f32 1.0, %v374
        %v376 = vrcp.pop %v330
        %v377 = vmul.f32 %v330, %v376
        %v378 = vsub.f32 1.0, %v377
        %v379 = vmul.f32 %v376, %v378
        %v380 = vadd.f32 %v376, %v379
        %vm381 = vweird.f32 %v330
        %vm382 = vweird.f32 %v376
        %vm383 = vmor %vm381, %vm382
        %v384 = vsel %vm383, %v376, %v380
        %v385 = vand.u32 2147483647, %v330
        %vm386 = vcmp.eq.f32.partialorder %v385, 8.507059e+37
        %v387 = vand.u32 %v330, 2147483648
        %v388 = vor.u32 1.1754944e-38, %v387
        %v389 = vsel %vm386, %v388, %v384
        %v390 = vmul.f32 1.0, %v389
        %v391 = vsub.f32 %v311, %v242
        %v392 = vsub.f32 %v312, %v245
        %v393 = vsub.f32 %v313, %v248
        %v394 = vsub.f32 %v314, %v251
        %v395 = vmul.f32 %v345, %v391
        %v396 = vmul.f32 %v360, %v392
        %v397 = vmul.f32 %v375, %v393
        %v398 = vmul.f32 %v390, %v394
        %v399 = vadd.f32 %v242, %v395
        %v400 = vadd.f32 %v245, %v396
        %v401 = vadd.f32 %v248, %v397
        %v402 = vadd.f32 %v251, %v398
        %403 = vst [vmem:[%s179] sm:$0xff] %v399
        %404 = vst [vmem:[%s179 + $0x8] sm:$0xff] %v400
        %405 = vst [vmem:[%s179 + $0x10] sm:$0xff] %v401
        %406 = vst [vmem:[%s179 + $0x18] sm:$0xff] %v402
        %s407 = sand.u32 %s94, 1
        %s408 = scalar_lea.sflag [#allocation4], %s407
        %s409 = sand.u32 %s94, 1
        %s410 = smul.addr %s409, 32
        %s411 = scalar_lea.vmem [#allocation5], %s410
        // Predicated region
        $region37: #{tpu_custom_call.1} parent=31 // pred_check
          %p412 = pneg %p104
        $region38: #{tpu_custom_call.1} parent=31 // pred_check_branch
          %414 = sbr.rel (%p412) target = $region40
        $region39: #{tpu_custom_call.1} parent=31 // pred_region
          %s415 = smul.u32 4, %s18
          %417 = vsyncadd %s408, 0
          %s418 = smul.addr %s415, 8
          %s419 = scalar_lea.hbm %s3, %s418
          %s420 = sshll.u32 %s411, 4
          %s421 = int_to_ptr.vmem [resolvable:$true] %s420
          %s422 = sshll.u32 %s419, 4
          %s423 = int_to_ptr.hbm [resolvable:$true] %s422
          %428 = dma.vmem_to_hbm [thread:$0]  %s421, 512, %s423, %s408, 128, 128, 8
        $region40: #{tpu_custom_call.1} parent=31 // pred_fallthru
          _
      $region32: #{tpu_custom_call.1} parent=5 // pred_fallthru
        _
      %p429 = scmp.le.s32.totalorder 2, %s13
      // Predicated region
      $region41: #{tpu_custom_call.1} parent=5 // pred_check
        %p430 = pneg %p429
      $region42: #{tpu_custom_call.1} parent=5 // pred_check_branch
        %432 = sbr.rel (%p430) target = $region44
      $region43: #{tpu_custom_call.1} parent=5 // pred_region
        %s433 = ssub.s32 %s13, 2
        // Predicated region
        $region45: #{tpu_custom_call.1} parent=43 // pred_check
          %p434 = pneg %p110
        $region46: #{tpu_custom_call.1} parent=43 // pred_check_branch
          %436 = sbr.rel (%p434) target = $region48
        $region47: #{tpu_custom_call.1} parent=43 // pred_region
          %s437 = sand.u32 %s95, 1
          %s438 = scalar_lea.sflag [#allocation4], %s437
          %s439 = sand.u32 %s95, 1
          %s440 = smul.addr %s439, 32
          %s441 = scalar_lea.vmem [#allocation5], %s440
          %443 = dma.done %s438, 512
        $region48: #{tpu_custom_call.1} parent=43 // pred_fallthru
          _
      $region44: #{tpu_custom_call.1} parent=5 // pred_fallthru
        _
    $region6: #{tpu_custom_call.1} parent=1 // loop_footer
      %s17 = sadd.s32 1, %s13
    $region7: #{tpu_custom_call.1} parent=1 // loop_footer_branch
      %12 = sbr.rel target = $region3
    $region8: #{tpu_custom_call.1} parent=1 // loop_exit
      _
    %444 = vsyncpa [#allocation3], 1
    %s445 = scalar_lea.sflag [#allocation3], 1
    %446 = vsyncpa %s445, 1
    %447 = vsyncpa [#allocation4], 1
    %s448 = scalar_lea.sflag [#allocation4], 1
    %449 = vsyncpa %s448, 1

</llo_original>
